<compile_context>
chip_gen: v6e
topology: v6e:2x2x1
jax: 0.10.0
libtpu: 0.0.40
codegen_flags: <defaults>
</compile_context>

<pallas_src>
import functools

import jax
import jax.numpy as jnp
from jax.experimental import pallas as pl
from jax.experimental.pallas import tpu as pltpu


# -----------------------------------------------------------------------------
# Generation-aware sizing helpers
# -----------------------------------------------------------------------------
def _vmem_cap_bytes():
    """Usable per-core VMEM budget (leave ~20% headroom for the compiler)."""
    try:
        cap = int(pltpu.get_tpu_info().vmem_capacity_bytes)
    except Exception:
        cap = 64 << 20          # conservative default (v7x has 64 MiB per core)
    return max(int(cap * 0.8), 32 << 20)


def _vmem_limit(needed_bytes, cap):
    """Explicit scoped-VMEM limit: estimated need (+25% slack), clamped to cap."""
    return int(min(max(needed_bytes + (needed_bytes >> 2), 32 << 20), cap))


def _exp_dtype():
    """bf16 exp on v6e/v7x (bf16 EUP); keep f32 on v5e and older (no bf16 EUP/VPU)."""
    try:
        kind = jax.devices()[0].device_kind.lower()
    except Exception:
        return jnp.float32
    if any(f"v{g}" in kind for g in (2, 3, 4, 5)):
        return jnp.float32
    return jnp.bfloat16


def _mha_vmem_bytes(C, Lk, tq):
    bf, f32 = 2, 4
    q_in = 2 * C * tq * bf               # query tile, double buffered
    out = 2 * C * tq * f32               # output tile, double buffered
    kv = 2 * Lk * C * bf                 # K + Vt, single buffered (pl.Buffered(1))
    wts = 2 * (2 * C * C * bf + 2 * C * f32)
    smax = 3 * Lk * tq * f32             # live per-head score / exp temporaries
    local = C * tq * (f32 + bf)          # q_t intermediate + head-output scratch
    return q_in + out + kv + wts + smax + local


def _pick_seq_tile(L, C, Lk, cap):
    """Largest lane-dense query tile dividing L that fits the VMEM budget."""
    for t in (1024, 512, 256, 128):
        if L % t == 0 and _mha_vmem_bytes(C, Lk, t) <= cap:
            return t
    # TODO(synk): pad L to a multiple of 128 instead of falling back to the full
    # (possibly lane-masked or oversized) block for awkward sequence lengths.
    return L


def _reduce_vmem_bytes(tk, P, C):
    bf, f32 = 2, 4
    return (2 * tk * P * bf                    # patch tile, double buffered
            + 2 * (P * C + 2 * C * C) * bf     # weights (double buffered)
            + 2 * 2 * tk * C * bf              # K and Vt output tiles
            + 3 * tk * C * f32)                # conv / LN f32 temporaries


def _pick_reduce_tile(L, P, C, cap):
    for t in (1024, 512, 256, 128):
        if L % t == 0 and _reduce_vmem_bytes(t, P, C) <= cap:
            return t
    return L


# -----------------------------------------------------------------------------
# Kernel 1: patch-reduce conv (kernel=stride=tile) + LayerNorm + K/V projections
# -----------------------------------------------------------------------------
def _reduce_kv_kernel(patch_ref, wc_ref, bc_ref, g_ref, bt_ref,
                      wk_ref, bk_ref, wv_ref, bvc_ref, k_ref, vt_ref):
    # patch_ref: (1, tk, P) bf16, P = C * tile^3, flattened in (c, kd, kh, kw) order
    # wc_ref:    (P, C)  bf16   conv weight reshaped + transposed
    # bc/g/bt/bk: (1, C) f32    conv bias, LN gamma/beta, K bias
    # wk_ref:    (C, C)  bf16   = wk.T
    # wv_ref:    (C, C)  bf16   = wv (original orientation)
    # bvc_ref:   (C, 1)  f32    V bias (column)
    # k_ref:     (1, tk, C) bf16 ; vt_ref: (1, C, tk) bf16
    p = patch_ref[0]                                                     # (tk, P)
    y = jnp.dot(p, wc_ref[...], preferred_element_type=jnp.float32) + bc_ref[...]
    mu = jnp.mean(y, axis=-1, keepdims=True)
    var = jnp.mean((y - mu) ** 2, axis=-1, keepdims=True)
    yn = (y - mu) * jax.lax.rsqrt(var + 1e-5) * g_ref[...] + bt_ref[...]  # (tk, C) f32
    ynb = yn.astype(jnp.bfloat16)

    # TODO(synk): for C < 128 the K/V projections use only C of the MXU lanes; a
    # merged (C, 2C) [K|V] projection (V half transposed via the XLU) would roughly
    # double MXU utilization for small C.
    k = jnp.dot(ynb, wk_ref[...], preferred_element_type=jnp.float32) + bk_ref[...]
    k_ref[0] = k.astype(jnp.bfloat16)                 # bf16 on store, f32 accumulation
    vt = jax.lax.dot_general(wv_ref[...], ynb, (((1,), (1,)), ((), ())),
                             preferred_element_type=jnp.float32) + bvc_ref[...]
    vt_ref[0] = vt.astype(jnp.bfloat16)               # (C, tk)


def reduce_kv_pallas(patches, wc, bc, g, bt, wk_t, bk, wv, bv_col, cap):
    B, Lk, P = patches.shape
    C = wc.shape[1]
    tk = _pick_reduce_tile(Lk, P, C, cap)
    return pl.pallas_call(
        _reduce_kv_kernel,
        out_shape=(jax.ShapeDtypeStruct((B, Lk, C), jnp.bfloat16),
                   jax.ShapeDtypeStruct((B, C, Lk), jnp.bfloat16)),
        grid=(B, Lk // tk),
        in_specs=[
            pl.BlockSpec((1, tk, P), lambda b, i: (b, i, 0)),
            pl.BlockSpec((P, C), lambda b, i: (0, 0)),
            pl.BlockSpec((1, C), lambda b, i: (0, 0)),
            pl.BlockSpec((1, C), lambda b, i: (0, 0)),
            pl.BlockSpec((1, C), lambda b, i: (0, 0)),
            pl.BlockSpec((C, C), lambda b, i: (0, 0)),
            pl.BlockSpec((1, C), lambda b, i: (0, 0)),
            pl.BlockSpec((C, C), lambda b, i: (0, 0)),
            pl.BlockSpec((C, 1), lambda b, i: (0, 0)),
        ],
        out_specs=(pl.BlockSpec((1, tk, C), lambda b, i: (b, i, 0)),
                   pl.BlockSpec((1, C, tk), lambda b, i: (b, 0, i))),
        compiler_params=pltpu.CompilerParams(
            dimension_semantics=("parallel", "parallel"),
            vmem_limit_bytes=_vmem_limit(_reduce_vmem_bytes(tk, P, C), cap)),
    )(patches, wc, bc, g, bt, wk_t, bk, wv, bv_col)


# -----------------------------------------------------------------------------
# Kernel 1' (tile == 1): plain K/V projection of the full sequence
# -----------------------------------------------------------------------------
def _kv_proj_kernel(xq_ref, wk_ref, bk_ref, wv_ref, bvc_ref, k_ref, vt_ref):
    xb = xq_ref[0]                                                       # (tk, C) bf16
    k = jnp.dot(xb, wk_ref[...], preferred_element_type=jnp.float32) + bk_ref[...]
    k_ref[0] = k.astype(jnp.bfloat16)
    vt = jax.lax.dot_general(wv_ref[...], xb, (((1,), (1,)), ((), ())),
                             preferred_element_type=jnp.float32) + bvc_ref[...]
    vt_ref[0] = vt.astype(jnp.bfloat16)


def kv_proj_pallas(xq, wk_t, bk, wv, bv_col, cap):
    B, L, C = xq.shape
    tk = _pick_reduce_tile(L, C, C, cap)
    return pl.pallas_call(
        _kv_proj_kernel,
        out_shape=(jax.ShapeDtypeStruct((B, L, C), jnp.bfloat16),
                   jax.ShapeDtypeStruct((B, C, L), jnp.bfloat16)),
        grid=(B, L // tk),
        in_specs=[
            pl.BlockSpec((1, tk, C), lambda b, i: (b, i, 0)),
            pl.BlockSpec((C, C), lambda b, i: (0, 0)),
            pl.BlockSpec((1, C), lambda b, i: (0, 0)),
            pl.BlockSpec((C, C), lambda b, i: (0, 0)),
            pl.BlockSpec((C, 1), lambda b, i: (0, 0)),
        ],
        out_specs=(pl.BlockSpec((1, tk, C), lambda b, i: (b, i, 0)),
                   pl.BlockSpec((1, C, tk), lambda b, i: (b, 0, i))),
        compiler_params=pltpu.CompilerParams(
            dimension_semantics=("parallel", "parallel"),
            vmem_limit_bytes=_vmem_limit(_reduce_vmem_bytes(tk, C, C), cap)),
    )(xq, wk_t, bk, wv, bv_col)


# -----------------------------------------------------------------------------
# Kernel 2: multi-head attention, tiled over the query sequence
# -----------------------------------------------------------------------------
def _mha_kernel(heads, exp_dtype, x_ref, k_ref, vt_ref, wq_ref, bqc_ref,
                wo_ref, boc_ref, o_ref, oh_ref):
    # x_ref:  (1, C, tq) bf16   query source in channels-first layout
    # k_ref:  (1, Lk, C) bf16   projected keys (scale folded into wq)
    # vt_ref: (1, C, Lk) bf16   projected values, transposed
    # wq_ref: (C, C) bf16 (scale pre-folded), bqc_ref: (C, 1) f32 (scale pre-folded)
    # wo_ref: (C, C) bf16, boc_ref: (C, 1) f32
    # o_ref:  (1, C, tq) f32    lane-dense output
    # oh_ref: (C, tq) bf16      per-head output scratch (rows h*dh:(h+1)*dh per head)
    xt = x_ref[0]                                                        # (C, tq)
    C = xt.shape[0]
    dh = C // heads

    qt = jnp.dot(wq_ref[...], xt,
                 preferred_element_type=jnp.float32) + bqc_ref[...]      # (C, tq) f32
    qtb = qt.astype(jnp.bfloat16)
    kb = k_ref[0]                                                        # (Lk, C) bf16
    vtb = vt_ref[0]                                                      # (C, Lk) bf16

    # TODO(synk): for very large heads*Lk*tq convert this static loop to a
    # lax.fori_loop over heads (pl.ds head slices) to bound live ranges.
    for h in range(heads):
        sl = slice(h * dh, (h + 1) * dh)
        # scores, transposed: (Lk, tq)
        st = jnp.dot(kb[:, sl], qtb[sl, :], preferred_element_type=jnp.float32)
        m = jnp.max(st, axis=0, keepdims=True)
        e = jnp.exp((st - m).astype(exp_dtype))          # bf16 exp on v6e/v7x
        r = pl.reciprocal(jnp.sum(e, axis=0, keepdims=True, dtype=jnp.float32),
                          approx=True)                   # (1, tq) f32
        # deferred normalization: PV first, then scale the small (dh, tq) result
        oht = jnp.dot(vtb[sl, :], e.astype(jnp.bfloat16),
                      preferred_element_type=jnp.float32)                # (dh, tq)
        oh_ref[sl, :] = (oht * r).astype(jnp.bfloat16)

    # single full-depth output projection (contraction K = C, not dh)
    o_ref[0] = jnp.dot(wo_ref[...], oh_ref[...],
                       preferred_element_type=jnp.float32) + boc_ref[...]


def mha_pallas(x_cl, k, v_t, wq, bq_col, wo, bo_col, heads, cap):
    B, C, Lq = x_cl.shape
    Lk = k.shape[1]
    tq = _pick_seq_tile(Lq, C, Lk, cap)
    kernel = functools.partial(_mha_kernel, heads, _exp_dtype())
    return pl.pallas_call(
        kernel,
        out_shape=jax.ShapeDtypeStruct((B, C, Lq), jnp.float32),
        grid=(B, Lq // tq),
        in_specs=[
            pl.BlockSpec((1, C, tq), lambda b, i: (b, 0, i)),
            # KV is invariant across the query-tile axis -> single-buffer it.
            pl.BlockSpec((1, Lk, C), lambda b, i: (b, 0, 0),
                         pipeline_mode=pl.Buffered(1)),
            pl.BlockSpec((1, C, Lk), lambda b, i: (b, 0, 0),
                         pipeline_mode=pl.Buffered(1)),
            pl.BlockSpec((C, C), lambda b, i: (0, 0)),
            pl.BlockSpec((C, 1), lambda b, i: (0, 0)),
            pl.BlockSpec((C, C), lambda b, i: (0, 0)),
            pl.BlockSpec((C, 1), lambda b, i: (0, 0)),
        ],
        out_specs=pl.BlockSpec((1, C, tq), lambda b, i: (b, 0, i)),
        scratch_shapes=[pltpu.VMEM((C, tq), jnp.bfloat16)],
        compiler_params=pltpu.CompilerParams(
            dimension_semantics=("parallel", "parallel"),
            vmem_limit_bytes=_vmem_limit(_mha_vmem_bytes(C, Lk, tq), cap)),
    )(x_cl, k, v_t, wq, bq_col, wo, bo_col)


# -----------------------------------------------------------------------------
# Module forward (glue: reshapes / weight re-layout only)
# -----------------------------------------------------------------------------
def efficient_mha_forward(x, params, heads, tile):
    B, C, D, H, W = x.shape
    Lq = D * H * W
    bf = jnp.bfloat16
    dh = C // heads
    scale = 1.0 / (float(dh) ** 0.5)
    cap = _vmem_cap_bytes()

    # cast once; all relayouts below (im2col transpose, reshape) happen in bf16
    xb = x.astype(bf)
    x_cl = xb.reshape(B, C, Lq)                                          # (B, C, Lq)

    # scale = 1/sqrt(dh) folded into the Q projection (one-time constant fold)
    wq = (params["wq"] * scale).astype(bf)     # (C, C) original orientation
    bq_col = params["bq"][:, None] * scale     # (C, 1) f32
    wo = params["wo"].astype(bf)               # (C, C) original orientation
    bo_col = params["bo"][:, None]
    wk_t = params["wk"].T.astype(bf)           # (C, C)
    bk_row = params["bk"][None, :]
    wv = params["wv"].astype(bf)               # (C, C) original orientation
    bv_col = params["bv"][:, None]

    if tile > 1:
        Dr, Hr, Wr = D // tile, H // tile, W // tile
        Lk = Dr * Hr * Wr
        P = C * tile ** 3
        # non-overlapping tile^3 patches, flattened in (c, kd, kh, kw) order
        xp = xb.reshape(B, C, Dr, tile, Hr, tile, Wr, tile)
        xp = jnp.transpose(xp, (0, 2, 4, 6, 1, 3, 5, 7))
        patches = xp.reshape(B, Lk, P)
        wc = params["conv_w"].reshape(C, P).T.astype(bf)                 # (P, C)
        k, v_t = reduce_kv_pallas(
            patches, wc,
            params["conv_b"][None, :], params["ln_g"][None, :], params["ln_b"][None, :],
            wk_t, bk_row, wv, bv_col, cap)
    else:
        # TODO(synk): with tile == 1 the KV length equals Lq and stays fully resident
        # per MHA grid step; a flash-style KV grid axis (online softmax) is needed
        # before this path is usable at realistic sequence lengths.
        xq = jnp.transpose(x_cl, (0, 2, 1))                              # (B, Lq, C)
        k, v_t = kv_proj_pallas(xq, wk_t, bk_row, wv, bv_col, cap)

    out_t = mha_pallas(x_cl, k, v_t, wq, bq_col, wo, bo_col, heads, cap)  # (B, C, Lq)
    return out_t.reshape(B, C, D, H, W)


# -----------------------------------------------------------------------------
# Pure-JAX f32 reference (for verification)
# -----------------------------------------------------------------------------
def reference_forward(x, params, heads, tile):
    B, C, D, H, W = x.shape
    if tile > 1:
        y = jax.lax.conv_general_dilated(
            x, params["conv_w"], (tile, tile, tile), "VALID",
            dimension_numbers=("NCDHW", "OIDHW", "NCDHW"))
        y = y + params["conv_b"][None, :, None, None, None]
        yt = jnp.transpose(y, (0, 2, 3, 4, 1))
        mu = yt.mean(-1, keepdims=True)
        var = ((yt - mu) ** 2).mean(-1, keepdims=True)
        yt = (yt - mu) / jnp.sqrt(var + 1e-5) * params["ln_g"] + params["ln_b"]
        reduced = yt.reshape(B, -1, C)
    else:
        reduced = jnp.transpose(x.reshape(B, C, -1), (0, 2, 1))
    xq = jnp.transpose(x.reshape(B, C, -1), (0, 2, 1))
    dh = C // heads
    q = xq @ params["wq"].T + params["bq"]
    k = reduced @ params["wk"].T + params["bk"]
    v = reduced @ params["wv"].T + params["bv"]
    split = lambda t: t.reshape(B, -1, heads, dh).transpose(0, 2, 1, 3)
    qh, kh, vh = split(q), split(k), split(v)
    s = jnp.einsum("bhqd,bhkd->bhqk", qh, kh) / jnp.sqrt(dh)
    p = jax.nn.softmax(s, axis=-1)
    o = jnp.einsum("bhqk,bhkd->bhqd", p, vh).transpose(0, 2, 1, 3).reshape(B, -1, C)
    o = o @ params["wo"].T + params["bo"]
    return jnp.transpose(o, (0, 2, 1)).reshape(B, C, D, H, W)


# -----------------------------------------------------------------------------
if __name__ == "__main__":
    B, C, D, H, W = 2, 32, 4, 4, 4
    heads, tile = 4, 2

    key = jax.random.PRNGKey(0)
    ks = jax.random.split(key, 12)
    f32 = jnp.float32
    params = {
        # reducer: Conv3d(dim, dim, tile, tile) + LayerNorm(dim)
        "conv_w": 0.05 * jax.random.normal(ks[0], (C, C, tile, tile, tile), f32),
        "conv_b": 0.05 * jax.random.normal(ks[1], (C,), f32),
        "ln_g": 1.0 + 0.1 * jax.random.normal(ks[2], (C,), f32),
        "ln_b": 0.1 * jax.random.normal(ks[3], (C,), f32),
        # nn.MultiheadAttention(dim, heads): in_proj (split into q/k/v) + out_proj
        "wq": 0.05 * jax.random.normal(ks[4], (C, C), f32),
        "wk": 0.05 * jax.random.normal(ks[5], (C, C), f32),
        "wv": 0.05 * jax.random.normal(ks[6], (C, C), f32),
        "bq": 0.05 * jax.random.normal(ks[7], (C,), f32),
        "bk": 0.05 * jax.random.normal(ks[8], (C,), f32),
        "bv": 0.05 * jax.random.normal(ks[9], (C,), f32),
        "wo": 0.05 * jax.random.normal(ks[10], (C, C), f32),
        "bo": 0.05 * jax.random.normal(ks[11], (C,), f32),
    }

    x = jax.random.normal(jax.random.PRNGKey(1), (B, C, D, H, W), f32)

    out = efficient_mha_forward(x, params, heads, tile)
    out = jax.block_until_ready(out)

    ref = jax.block_until_ready(reference_forward(x, params, heads, tile))
    assert out.shape == (B, C, D, H, W)
    # bf16 MXU inputs / bf16 KV with f32 accumulation -> compare against the f32
    # reference at a bf16-appropriate tolerance.
    assert jnp.allclose(out, ref, atol=1e-2, rtol=1e-2), (
        f"max abs err {jnp.max(jnp.abs(out - ref))}")

    print("KERNEL_OK")
</pallas_src>

<mosaic_0001>
module attributes {stable_mosaic.version = 11 : i64} {
  func.func @_reduce_kv_kernel(%arg0: i32, %arg1: i32, %arg2: memref<1x8x256xbf16, #tpu.memory_space<vmem>>, %arg3: memref<256x32xbf16, #tpu.memory_space<vmem>>, %arg4: memref<1x32xf32, #tpu.memory_space<vmem>>, %arg5: memref<1x32xf32, #tpu.memory_space<vmem>>, %arg6: memref<1x32xf32, #tpu.memory_space<vmem>>, %arg7: memref<32x32xbf16, #tpu.memory_space<vmem>>, %arg8: memref<1x32xf32, #tpu.memory_space<vmem>>, %arg9: memref<32x32xbf16, #tpu.memory_space<vmem>>, %arg10: memref<32x1xf32, #tpu.memory_space<vmem>>, %arg11: memref<1x8x32xbf16, #tpu.memory_space<vmem>>, %arg12: memref<1x32x8xbf16, #tpu.memory_space<vmem>>) attributes {dimension_semantics = [#tpu.dimension_semantics<parallel>, #tpu.dimension_semantics<parallel>], iteration_bounds = array<i64: 2, 1>, scalar_prefetch = 0 : i64, scratch_operands = 0 : i64, tpu.core_type = #tpu.core_type<tc>, window_params = [{transform_indices = @transform_0, window_bounds = array<i64: 1, 8, 256>}, {pipeline_mode = #tpu.pipeline_mode<synchronous>, transform_indices = @transform_1, window_bounds = array<i64: 256, 32>}, {pipeline_mode = #tpu.pipeline_mode<synchronous>, transform_indices = @transform_2, window_bounds = array<i64: 1, 32>}, {pipeline_mode = #tpu.pipeline_mode<synchronous>, transform_indices = @transform_3, window_bounds = array<i64: 1, 32>}, {pipeline_mode = #tpu.pipeline_mode<synchronous>, transform_indices = @transform_4, window_bounds = array<i64: 1, 32>}, {pipeline_mode = #tpu.pipeline_mode<synchronous>, transform_indices = @transform_5, window_bounds = array<i64: 32, 32>}, {pipeline_mode = #tpu.pipeline_mode<synchronous>, transform_indices = @transform_6, window_bounds = array<i64: 1, 32>}, {pipeline_mode = #tpu.pipeline_mode<synchronous>, transform_indices = @transform_7, window_bounds = array<i64: 32, 32>}, {pipeline_mode = #tpu.pipeline_mode<synchronous>, transform_indices = @transform_8, window_bounds = array<i64: 32, 1>}, {transform_indices = @transform_9, window_bounds = array<i64: 1, 8, 32>}, {transform_indices = @transform_10, window_bounds = array<i64: 1, 32, 8>}]} {
    %c0 = arith.constant 0 : index
    %c0_0 = arith.constant 0 : index
    %c0_1 = arith.constant 0 : index
    %0 = vector.load %arg2[%c0, %c0_0, %c0_1] : memref<1x8x256xbf16, #tpu.memory_space<vmem>>, vector<1x8x256xbf16>
    %1 = vector.shape_cast %0 : vector<1x8x256xbf16> to vector<8x256xbf16>
    %c0_2 = arith.constant 0 : index
    %c0_3 = arith.constant 0 : index
    %2 = vector.load %arg3[%c0_2, %c0_3] : memref<256x32xbf16, #tpu.memory_space<vmem>>, vector<256x32xbf16>
    %cst = arith.constant dense<0.000000e+00> : vector<8x32xf32>
    %3 = tpu.matmul %1, %2, %cst {dimension_numbers = #tpu.dot_dimension_numbers<[1], [0], [0], [1], [0, 0, 1, 1], [], []>} : vector<8x256xbf16>, vector<256x32xbf16>, vector<8x32xf32> -> vector<8x32xf32>
    %c0_4 = arith.constant 0 : index
    %c0_5 = arith.constant 0 : index
    %4 = vector.load %arg4[%c0_4, %c0_5] : memref<1x32xf32, #tpu.memory_space<vmem>>, vector<1x32xf32>
    %5 = vector.broadcast %4 : vector<1x32xf32> to vector<8x32xf32>
    %6 = arith.addf %3, %5 : vector<8x32xf32>
    %cst_6 = arith.constant dense<0.000000e+00> : vector<8xf32>
    %7 = vector.multi_reduction <add>, %6, %cst_6 [1] : vector<8x32xf32> to vector<8xf32>
    %8 = vector.shape_cast %7 : vector<8xf32> to vector<8x1xf32>
    %cst_7 = arith.constant 3.200000e+01 : f32
    %9 = vector.broadcast %cst_7 : f32 to vector<8x1xf32>
    %10 = arith.divf %8, %9 : vector<8x1xf32>
    %11 = vector.broadcast %10 : vector<8x1xf32> to vector<8x32xf32>
    %12 = arith.subf %6, %11 : vector<8x32xf32>
    %13 = arith.mulf %12, %12 : vector<8x32xf32>
    %cst_8 = arith.constant dense<0.000000e+00> : vector<8xf32>
    %14 = vector.multi_reduction <add>, %13, %cst_8 [1] : vector<8x32xf32> to vector<8xf32>
    %15 = vector.shape_cast %14 : vector<8xf32> to vector<8x1xf32>
    %cst_9 = arith.constant 3.200000e+01 : f32
    %16 = vector.broadcast %cst_9 : f32 to vector<8x1xf32>
    %17 = arith.divf %15, %16 : vector<8x1xf32>
    %18 = vector.broadcast %10 : vector<8x1xf32> to vector<8x32xf32>
    %19 = arith.subf %6, %18 : vector<8x32xf32>
    %cst_10 = arith.constant 9.99999974E-6 : f32
    %20 = vector.broadcast %cst_10 : f32 to vector<8x1xf32>
    %21 = arith.addf %17, %20 : vector<8x1xf32>
    %22 = math.rsqrt %21 : vector<8x1xf32>
    %23 = vector.broadcast %22 : vector<8x1xf32> to vector<8x32xf32>
    %24 = arith.mulf %19, %23 : vector<8x32xf32>
    %c0_11 = arith.constant 0 : index
    %c0_12 = arith.constant 0 : index
    %25 = vector.load %arg5[%c0_11, %c0_12] : memref<1x32xf32, #tpu.memory_space<vmem>>, vector<1x32xf32>
    %26 = vector.broadcast %25 : vector<1x32xf32> to vector<8x32xf32>
    %27 = arith.mulf %24, %26 : vector<8x32xf32>
    %c0_13 = arith.constant 0 : index
    %c0_14 = arith.constant 0 : index
    %28 = vector.load %arg6[%c0_13, %c0_14] : memref<1x32xf32, #tpu.memory_space<vmem>>, vector<1x32xf32>
    %29 = vector.broadcast %28 : vector<1x32xf32> to vector<8x32xf32>
    %30 = arith.addf %27, %29 : vector<8x32xf32>
    %31 = arith.truncf %30 : vector<8x32xf32> to vector<8x32xbf16>
    %c0_15 = arith.constant 0 : index
    %c0_16 = arith.constant 0 : index
    %32 = vector.load %arg7[%c0_15, %c0_16] : memref<32x32xbf16, #tpu.memory_space<vmem>>, vector<32x32xbf16>
    %cst_17 = arith.constant dense<0.000000e+00> : vector<8x32xf32>
    %33 = tpu.matmul %31, %32, %cst_17 {dimension_numbers = #tpu.dot_dimension_numbers<[1], [0], [0], [1], [0, 0, 1, 1], [], []>} : vector<8x32xbf16>, vector<32x32xbf16>, vector<8x32xf32> -> vector<8x32xf32>
    %c0_18 = arith.constant 0 : index
    %c0_19 = arith.constant 0 : index
    %34 = vector.load %arg8[%c0_18, %c0_19] : memref<1x32xf32, #tpu.memory_space<vmem>>, vector<1x32xf32>
    %35 = vector.broadcast %34 : vector<1x32xf32> to vector<8x32xf32>
    %36 = arith.addf %33, %35 : vector<8x32xf32>
    %37 = arith.truncf %36 : vector<8x32xf32> to vector<8x32xbf16>
    %c0_20 = arith.constant 0 : index
    %c0_21 = arith.constant 0 : index
    %c0_22 = arith.constant 0 : index
    %38 = vector.load %arg11[%c0_20, %c0_21, %c0_22] : memref<1x8x32xbf16, #tpu.memory_space<vmem>>, vector<1x8x32xbf16>
    %39 = vector.shape_cast %38 : vector<1x8x32xbf16> to vector<8x32xbf16>
    %40 = vector.shape_cast %37 : vector<8x32xbf16> to vector<1x8x32xbf16>
    tpu.vector_store %arg11[%c0_20, %c0_21, %c0_22], %40 {strides = array<i32>} : memref<1x8x32xbf16, #tpu.memory_space<vmem>>, vector<1x8x32xbf16>,
    %c0_23 = arith.constant 0 : index
    %c0_24 = arith.constant 0 : index
    %41 = vector.load %arg9[%c0_23, %c0_24] : memref<32x32xbf16, #tpu.memory_space<vmem>>, vector<32x32xbf16>
    %cst_25 = arith.constant dense<0.000000e+00> : vector<32x8xf32>
    %42 = tpu.matmul %41, %31, %cst_25 {dimension_numbers = #tpu.dot_dimension_numbers<[1], [1], [0], [0], [0, 0, 1, 0], [], []>} : vector<32x32xbf16>, vector<8x32xbf16>, vector<32x8xf32> -> vector<32x8xf32>
    %c0_26 = arith.constant 0 : index
    %c0_27 = arith.constant 0 : index
    %43 = vector.load %arg10[%c0_26, %c0_27] : memref<32x1xf32, #tpu.memory_space<vmem>>, vector<32x1xf32>
    %44 = vector.broadcast %43 : vector<32x1xf32> to vector<32x8xf32>
    %45 = arith.addf %42, %44 : vector<32x8xf32>
    %46 = arith.truncf %45 : vector<32x8xf32> to vector<32x8xbf16>
    %c0_28 = arith.constant 0 : index
    %c0_29 = arith.constant 0 : index
    %c0_30 = arith.constant 0 : index
    %47 = vector.load %arg12[%c0_28, %c0_29, %c0_30] : memref<1x32x8xbf16, #tpu.memory_space<vmem>>, vector<1x32x8xbf16>
    %48 = vector.shape_cast %47 : vector<1x32x8xbf16> to vector<32x8xbf16>
    %49 = vector.shape_cast %46 : vector<32x8xbf16> to vector<1x32x8xbf16>
    tpu.vector_store %arg12[%c0_28, %c0_29, %c0_30], %49 {strides = array<i32>} : memref<1x32x8xbf16, #tpu.memory_space<vmem>>, vector<1x32x8xbf16>,
    return
  }
  func.func @transform_0(%arg0: i32, %arg1: i32) -> (i32, i32, i32) {
    %c0_i32 = arith.constant 0 : i32
    %c0_i32_0 = arith.constant 0 : i32
    return %arg0, %arg1, %c0_i32 : i32, i32, i32
  }
  func.func @transform_1(%arg0: i32, %arg1: i32) -> (i32, i32) {
    %c0_i32 = arith.constant 0 : i32
    %c0_i32_0 = arith.constant 0 : i32
    %c0_i32_1 = arith.constant 0 : i32
    return %c0_i32, %c0_i32_0 : i32, i32
  }
  func.func @transform_2(%arg0: i32, %arg1: i32) -> (i32, i32) {
    %c0_i32 = arith.constant 0 : i32
    %c0_i32_0 = arith.constant 0 : i32
    %c0_i32_1 = arith.constant 0 : i32
    return %c0_i32, %c0_i32_0 : i32, i32
  }
  func.func @transform_3(%arg0: i32, %arg1: i32) -> (i32, i32) {
    %c0_i32 = arith.constant 0 : i32
    %c0_i32_0 = arith.constant 0 : i32
    %c0_i32_1 = arith.constant 0 : i32
    return %c0_i32, %c0_i32_0 : i32, i32
  }
  func.func @transform_4(%arg0: i32, %arg1: i32) -> (i32, i32) {
    %c0_i32 = arith.constant 0 : i32
    %c0_i32_0 = arith.constant 0 : i32
    %c0_i32_1 = arith.constant 0 : i32
    return %c0_i32, %c0_i32_0 : i32, i32
  }
  func.func @transform_5(%arg0: i32, %arg1: i32) -> (i32, i32) {
    %c0_i32 = arith.constant 0 : i32
    %c0_i32_0 = arith.constant 0 : i32
    %c0_i32_1 = arith.constant 0 : i32
    return %c0_i32, %c0_i32_0 : i32, i32
  }
  func.func @transform_6(%arg0: i32, %arg1: i32) -> (i32, i32) {
    %c0_i32 = arith.constant 0 : i32
    %c0_i32_0 = arith.constant 0 : i32
    %c0_i32_1 = arith.constant 0 : i32
    return %c0_i32, %c0_i32_0 : i32, i32
  }
  func.func @transform_7(%arg0: i32, %arg1: i32) -> (i32, i32) {
    %c0_i32 = arith.constant 0 : i32
    %c0_i32_0 = arith.constant 0 : i32
    %c0_i32_1 = arith.constant 0 : i32
    return %c0_i32, %c0_i32_0 : i32, i32
  }
  func.func @transform_8(%arg0: i32, %arg1: i32) -> (i32, i32) {
    %c0_i32 = arith.constant 0 : i32
    %c0_i32_0 = arith.constant 0 : i32
    %c0_i32_1 = arith.constant 0 : i32
    return %c0_i32, %c0_i32_0 : i32, i32
  }
  func.func @transform_9(%arg0: i32, %arg1: i32) -> (i32, i32, i32) {
    %c0_i32 = arith.constant 0 : i32
    %c0_i32_0 = arith.constant 0 : i32
    return %arg0, %arg1, %c0_i32 : i32, i32, i32
  }
  func.func @transform_10(%arg0: i32, %arg1: i32) -> (i32, i32, i32) {
    %c0_i32 = arith.constant 0 : i32
    %c0_i32_0 = arith.constant 0 : i32
    return %arg0, %c0_i32, %arg1 : i32, i32, i32
  }
}

</mosaic_0001>

<llo_original>
// kernel: tpu_custom_call.1
$region0: #{tpu_custom_call.1}
  #allocation0 [shape = 'u32[]', space=smem, size = 0x4, offset = 0x4, fixed_abs, tag = 'smem constant byte address 0x4 - core index']
  #allocation1 [shape = 'u32[144,128]{1,0:T(1,128)}', space=vmem, size = 0x12000, scoped, tag = 'internal scratch']
  %s0 = inlined_call_operand.vmem [shape: bf16[2,8,256], index: 0, kind: input, shape index: {}]
  %s1 = inlined_call_operand.vmem [shape: bf16[256,32], index: 1, kind: input, shape index: {}]
  %s2 = inlined_call_operand.vmem [shape: f32[1,32], index: 2, kind: input, shape index: {}]
  %s3 = inlined_call_operand.vmem [shape: f32[1,32], index: 3, kind: input, shape index: {}]
  %s4 = inlined_call_operand.vmem [shape: f32[1,32], index: 4, kind: input, shape index: {}]
  %s5 = inlined_call_operand.vmem [shape: bf16[32,32], index: 5, kind: input, shape index: {}]
  %s6 = inlined_call_operand.vmem [shape: f32[1,32], index: 6, kind: input, shape index: {}]
  %s7 = inlined_call_operand.vmem [shape: bf16[32,32], index: 7, kind: input, shape index: {}]
  %s8 = inlined_call_operand.vmem [shape: f32[32,1], index: 8, kind: input, shape index: {}]
  %s9 = inlined_call_operand.hbm [shape: bf16[2,8,32], index: 9, kind: output, shape index: {0}]
  %s10 = inlined_call_operand.vmem [shape: bf16[2,32,8], index: 10, kind: output, shape index: {1}]
  %11 = xla_tuple %s9, %s10
  %s12 = sld [smem:[#allocation0]]
  $region77: #{tpu_custom_call.1} parent=0
    _
  %s14 = ssub.s32 1, %s12
  %s15 = scalar_select 0, %s14, %s12
  $region1: #{tpu_custom_call.1} parent=0
    #allocation2 [shape = 'u8[4096]{0}', space=vmem, size = 0x1000, scoped, tag = 'output window, operand 0']
    #allocation3 [shape = 's32[2]{0}', space=sflag, size = 0x8, scoped, tag = 'scoped memory for tpu_custom_call.1']
    %16 = vsyncpa [#allocation3], 0
    %s17 = scalar_lea.sflag [#allocation3], 1
    %18 = vsyncpa %s17, 0
    loop: start=0, step=1, limit=4
    $region2: #{tpu_custom_call.1} parent=1 // loop_pre_header
      _
    $region3: #{tpu_custom_call.1} parent=1 // loop_header
      %s20 = sphi 0, %s24
      %p21 = scmp.ge.s32.totalorder %s20, 4
      %s27 = sphi 0, %s39
      %s28 = sphi 0, %s35
      %s29 = sphi 0, %s27
      %s30 = sphi 0, %s28
      %s31 = sphi 0, %s29
      %s32 = sphi 0, %s30
      %s44 = sphi 0, %s46
      %s47 = sphi 0, %s44
      %s48 = sphi 0, %s47
      %s64 = sphi 0, %s48
      %s68 = sphi 0, %s68
      %s70 = sphi 0, %s68
      %s71 = sphi 0, %s70
      %s85 = sphi 0, %s71
      %s89 = sphi 0, %s89
      %s91 = sphi 0, %s89
      %s92 = sphi 0, %s91
      %s106 = sphi 0, %s92
      %s110 = sphi 0, %s110
      %s112 = sphi 0, %s110
      %s113 = sphi 0, %s112
      %s127 = sphi 0, %s113
      %s131 = sphi 0, %s131
      %s133 = sphi 0, %s131
      %s134 = sphi 0, %s133
      %s148 = sphi 0, %s134
      %s152 = sphi 0, %s152
      %s154 = sphi 0, %s152
      %s155 = sphi 0, %s154
      %s169 = sphi 0, %s155
      %s173 = sphi 0, %s173
      %s175 = sphi 0, %s173
      %s176 = sphi 0, %s175
      %s190 = sphi 0, %s176
      %s194 = sphi 0, %s194
      %s196 = sphi 0, %s194
      %s197 = sphi 0, %s196
      %s211 = sphi 0, %s197
      %s215 = sphi 0, %s215
      %s217 = sphi 0, %s215
      %s218 = sphi 0, %s217
      %s232 = sphi 0, %s218
      %s240 = sphi 0, %s242
      %s243 = sphi 0, %s240
      %s244 = sphi 0, %s243
      %s260 = sphi 0, %s244
      %s268 = sphi 0, %s270
      %s271 = sphi 0, %s268
      %s272 = sphi 0, %s271
      %s288 = sphi 0, %s272
    $region4: #{tpu_custom_call.1} parent=1 // loop_header_branch
      %23 = sbr.rel (%p21) target = $region8
    $region5: #{tpu_custom_call.1} parent=1 // loop_body
      %s25 = ssub.s32 %s20, 1
      %s26 = ssub.s32 %s20, 2
      %s33 = sadd.s32 1, %s28
      %p34 = scmp.ge.s32.totalorder %s33, 1
      %s35 = scalar_select %p34, 0, %s33
      %s36 = sadd.s32 1, %s27
      %s37 = scalar_select %p34, %s36, %s27
      %p38 = scmp.ge.s32.totalorder %s37, 2
      %s39 = scalar_select %p38, 0, %s37
      %s40 = ssub.s32 %s27, %s39
      %s41 = ssub.s32 %s28, %s35
      %s42 = sor.u32 %s40, %s41
      %p43 = scmp.eq.s32.totalorder %s42, 0
      %s45 = sadd.s32 %s44, 1
      %s46 = scalar_select %p43, %s44, %s45
      %p49 = pneg %p43
      %p50 = scmp.eq.s32.totalorder %s20, 1
      %p51 = por %p49, %p50
      %p52 = scmp.ne.s32.totalorder %s44, %s47
      %p53 = scmp.eq.s32.totalorder %s20, 0
      %p54 = por %p52, %p53
      %p55 = scmp.ne.s32.totalorder %s44, %s47
      %p56 = scmp.eq.s32.totalorder %s25, 1
      %p57 = por %p55, %p56
      %p58 = scmp.ne.s32.totalorder %s47, %s48
      %p59 = scmp.eq.s32.totalorder %s25, 0
      %p60 = por %p58, %p59
      %p61 = scmp.ne.s32.totalorder %s47, %s48
      %p62 = scmp.eq.s32.totalorder %s26, 1
      %p63 = por %p61, %p62
      %p65 = scmp.ne.s32.totalorder %s48, %s64
      %p66 = scmp.eq.s32.totalorder %s26, 0
      %p67 = por %p65, %p66
      %s69 = sadd.s32 %s68, 1
      %p72 = scmp.eq.s32.totalorder %s20, 1
      %p73 = scmp.ne.s32.totalorder %s68, %s70
      %p74 = scmp.eq.s32.totalorder %s20, 0
      %p75 = por %p73, %p74
      %p76 = scmp.ne.s32.totalorder %s68, %s70
      %p77 = scmp.eq.s32.totalorder %s25, 1
      %p78 = por %p76, %p77
      %p79 = scmp.ne.s32.totalorder %s70, %s71
      %p80 = scmp.eq.s32.totalorder %s25, 0
      %p81 = por %p79, %p80
      %p82 = scmp.ne.s32.totalorder %s70, %s71
      %p83 = scmp.eq.s32.totalorder %s26, 1
      %p84 = por %p82, %p83
      %p86 = scmp.ne.s32.totalorder %s71, %s85
      %p87 = scmp.eq.s32.totalorder %s26, 0
      %p88 = por %p86, %p87
      %s90 = sadd.s32 %s89, 1
      %p93 = scmp.eq.s32.totalorder %s20, 1
      %p94 = scmp.ne.s32.totalorder %s89, %s91
      %p95 = scmp.eq.s32.totalorder %s20, 0
      %p96 = por %p94, %p95
      %p97 = scmp.ne.s32.totalorder %s89, %s91
      %p98 = scmp.eq.s32.totalorder %s25, 1
      %p99 = por %p97, %p98
      %p100 = scmp.ne.s32.totalorder %s91, %s92
      %p101 = scmp.eq.s32.totalorder %s25, 0
      %p102 = por %p100, %p101
      %p103 = scmp.ne.s32.totalorder %s91, %s92
      %p104 = scmp.eq.s32.totalorder %s26, 1
      %p105 = por %p103, %p104
      %p107 = scmp.ne.s32.totalorder %s92, %s106
      %p108 = scmp.eq.s32.totalorder %s26, 0
      %p109 = por %p107, %p108
      %s111 = sadd.s32 %s110, 1
      %p114 = scmp.eq.s32.totalorder %s20, 1
      %p115 = scmp.ne.s32.totalorder %s110, %s112
      %p116 = scmp.eq.s32.totalorder %s20, 0
      %p117 = por %p115, %p116
      %p118 = scmp.ne.s32.totalorder %s110, %s112
      %p119 = scmp.eq.s32.totalorder %s25, 1
      %p120 = por %p118, %p119
      %p121 = scmp.ne.s32.totalorder %s112, %s113
      %p122 = scmp.eq.s32.totalorder %s25, 0
      %p123 = por %p121, %p122
      %p124 = scmp.ne.s32.totalorder %s112, %s113
      %p125 = scmp.eq.s32.totalorder %s26, 1
      %p126 = por %p124, %p125
      %p128 = scmp.ne.s32.totalorder %s113, %s127
      %p129 = scmp.eq.s32.totalorder %s26, 0
      %p130 = por %p128, %p129
      %s132 = sadd.s32 %s131, 1
      %p135 = scmp.eq.s32.totalorder %s20, 1
      %p136 = scmp.ne.s32.totalorder %s131, %s133
      %p137 = scmp.eq.s32.totalorder %s20, 0
      %p138 = por %p136, %p137
      %p139 = scmp.ne.s32.totalorder %s131, %s133
      %p140 = scmp.eq.s32.totalorder %s25, 1
      %p141 = por %p139, %p140
      %p142 = scmp.ne.s32.totalorder %s133, %s134
      %p143 = scmp.eq.s32.totalorder %s25, 0
      %p144 = por %p142, %p143
      %p145 = scmp.ne.s32.totalorder %s133, %s134
      %p146 = scmp.eq.s32.totalorder %s26, 1
      %p147 = por %p145, %p146
      %p149 = scmp.ne.s32.totalorder %s134, %s148
      %p150 = scmp.eq.s32.totalorder %s26, 0
      %p151 = por %p149, %p150
      %s153 = sadd.s32 %s152, 1
      %p156 = scmp.eq.s32.totalorder %s20, 1
      %p157 = scmp.ne.s32.totalorder %s152, %s154
      %p158 = scmp.eq.s32.totalorder %s20, 0
      %p159 = por %p157, %p158
      %p160 = scmp.ne.s32.totalorder %s152, %s154
      %p161 = scmp.eq.s32.totalorder %s25, 1
      %p162 = por %p160, %p161
      %p163 = scmp.ne.s32.totalorder %s154, %s155
      %p164 = scmp.eq.s32.totalorder %s25, 0
      %p165 = por %p163, %p164
      %p166 = scmp.ne.s32.totalorder %s154, %s155
      %p167 = scmp.eq.s32.totalorder %s26, 1
      %p168 = por %p166, %p167
      %p170 = scmp.ne.s32.totalorder %s155, %s169
      %p171 = scmp.eq.s32.totalorder %s26, 0
      %p172 = por %p170, %p171
      %s174 = sadd.s32 %s173, 1
      %p177 = scmp.eq.s32.totalorder %s20, 1
      %p178 = scmp.ne.s32.totalorder %s173, %s175
      %p179 = scmp.eq.s32.totalorder %s20, 0
      %p180 = por %p178, %p179
      %p181 = scmp.ne.s32.totalorder %s173, %s175
      %p182 = scmp.eq.s32.totalorder %s25, 1
      %p183 = por %p181, %p182
      %p184 = scmp.ne.s32.totalorder %s175, %s176
      %p185 = scmp.eq.s32.totalorder %s25, 0
      %p186 = por %p184, %p185
      %p187 = scmp.ne.s32.totalorder %s175, %s176
      %p188 = scmp.eq.s32.totalorder %s26, 1
      %p189 = por %p187, %p188
      %p191 = scmp.ne.s32.totalorder %s176, %s190
      %p192 = scmp.eq.s32.totalorder %s26, 0
      %p193 = por %p191, %p192
      %s195 = sadd.s32 %s194, 1
      %p198 = scmp.eq.s32.totalorder %s20, 1
      %p199 = scmp.ne.s32.totalorder %s194, %s196
      %p200 = scmp.eq.s32.totalorder %s20, 0
      %p201 = por %p199, %p200
      %p202 = scmp.ne.s32.totalorder %s194, %s196
      %p203 = scmp.eq.s32.totalorder %s25, 1
      %p204 = por %p202, %p203
      %p205 = scmp.ne.s32.totalorder %s196, %s197
      %p206 = scmp.eq.s32.totalorder %s25, 0
      %p207 = por %p205, %p206
      %p208 = scmp.ne.s32.totalorder %s196, %s197
      %p209 = scmp.eq.s32.totalorder %s26, 1
      %p210 = por %p208, %p209
      %p212 = scmp.ne.s32.totalorder %s197, %s211
      %p213 = scmp.eq.s32.totalorder %s26, 0
      %p214 = por %p212, %p213
      %s216 = sadd.s32 %s215, 1
      %p219 = scmp.eq.s32.totalorder %s20, 1
      %p220 = scmp.ne.s32.totalorder %s215, %s217
      %p221 = scmp.eq.s32.totalorder %s20, 0
      %p222 = por %p220, %p221
      %p223 = scmp.ne.s32.totalorder %s215, %s217
      %p224 = scmp.eq.s32.totalorder %s25, 1
      %p225 = por %p223, %p224
      %p226 = scmp.ne.s32.totalorder %s217, %s218
      %p227 = scmp.eq.s32.totalorder %s25, 0
      %p228 = por %p226, %p227
      %p229 = scmp.ne.s32.totalorder %s217, %s218
      %p230 = scmp.eq.s32.totalorder %s26, 1
      %p231 = por %p229, %p230
      %p233 = scmp.ne.s32.totalorder %s218, %s232
      %p234 = scmp.eq.s32.totalorder %s26, 0
      %p235 = por %p233, %p234
      %s236 = ssub.s32 %s27, %s39
      %s237 = ssub.s32 %s28, %s35
      %s238 = sor.u32 %s236, %s237
      %p239 = scmp.eq.s32.totalorder %s238, 0
      %s241 = sadd.s32 %s240, 1
      %s242 = scalar_select %p239, %s240, %s241
      %p245 = pneg %p239
      %p246 = scmp.eq.s32.totalorder %s20, 1
      %p247 = por %p245, %p246
      %p248 = scmp.ne.s32.totalorder %s240, %s243
      %p249 = scmp.eq.s32.totalorder %s20, 0
      %p250 = por %p248, %p249
      %p251 = scmp.ne.s32.totalorder %s240, %s243
      %p252 = scmp.eq.s32.totalorder %s25, 1
      %p253 = por %p251, %p252
      %p254 = scmp.ne.s32.totalorder %s243, %s244
      %p255 = scmp.eq.s32.totalorder %s25, 0
      %p256 = por %p254, %p255
      %p257 = scmp.ne.s32.totalorder %s243, %s244
      %p258 = scmp.eq.s32.totalorder %s26, 1
      %p259 = por %p257, %p258
      %p261 = scmp.ne.s32.totalorder %s244, %s260
      %p262 = scmp.eq.s32.totalorder %s26, 0
      %p263 = por %p261, %p262
      %s264 = ssub.s32 %s27, %s39
      %s265 = ssub.s32 %s28, %s35
      %s266 = sor.u32 %s264, %s265
      %p267 = scmp.eq.s32.totalorder %s266, 0
      %s269 = sadd.s32 %s268, 1
      %s270 = scalar_select %p267, %s268, %s269
      %p273 = pneg %p267
      %p274 = scmp.eq.s32.totalorder %s20, 1
      %p275 = por %p273, %p274
      %p276 = scmp.ne.s32.totalorder %s268, %s271
      %p277 = scmp.eq.s32.totalorder %s20, 0
      %p278 = por %p276, %p277
      %p279 = scmp.ne.s32.totalorder %s268, %s271
      %p280 = scmp.eq.s32.totalorder %s25, 1
      %p281 = por %p279, %p280
      %p282 = scmp.ne.s32.totalorder %s271, %s272
      %p283 = scmp.eq.s32.totalorder %s25, 0
      %p284 = por %p282, %p283
      %p285 = scmp.ne.s32.totalorder %s271, %s272
      %p286 = scmp.eq.s32.totalorder %s26, 1
      %p287 = por %p285, %p286
      %p289 = scmp.ne.s32.totalorder %s272, %s288
      %p290 = scmp.eq.s32.totalorder %s26, 0
      %p291 = por %p289, %p290
      %p292 = scmp.le.s32.totalorder 1, %s20
      %p293 = scmp.lt.s32.totalorder %s20, 3
      %p294 = pnand %p292, %p293
      %p295 = pneg %p294
      // Predicated region
      $region9: #{tpu_custom_call.1} parent=5 // pred_check
        _
      $region10: #{tpu_custom_call.1} parent=5 // pred_check_branch
        %297 = sbr.rel (%p294) target = $region12
      $region11: #{tpu_custom_call.1} parent=5 // pred_region
        %s298 = ssub.s32 %s20, 1
        // Predicated region
        $region13: #{tpu_custom_call.1} parent=11 // pred_check
          %p299 = pneg %p81
        $region14: #{tpu_custom_call.1} parent=11 // pred_check_branch
          %301 = sbr.rel (%p299) target = $region16
        $region15: #{tpu_custom_call.1} parent=11 // pred_region
          _
        $region16: #{tpu_custom_call.1} parent=11 // pred_fallthru
          _
        // Predicated region
        $region17: #{tpu_custom_call.1} parent=11 // pred_check
          %p302 = pneg %p102
        $region18: #{tpu_custom_call.1} parent=11 // pred_check_branch
          %304 = sbr.rel (%p302) target = $region20
        $region19: #{tpu_custom_call.1} parent=11 // pred_region
          _
        $region20: #{tpu_custom_call.1} parent=11 // pred_fallthru
          _
        // Predicated region
        $region21: #{tpu_custom_call.1} parent=11 // pred_check
          %p305 = pneg %p123
        $region22: #{tpu_custom_call.1} parent=11 // pred_check_branch
          %307 = sbr.rel (%p305) target = $region24
        $region23: #{tpu_custom_call.1} parent=11 // pred_region
          _
        $region24: #{tpu_custom_call.1} parent=11 // pred_fallthru
          _
        // Predicated region
        $region25: #{tpu_custom_call.1} parent=11 // pred_check
          %p308 = pneg %p144
        $region26: #{tpu_custom_call.1} parent=11 // pred_check_branch
          %310 = sbr.rel (%p308) target = $region28
        $region27: #{tpu_custom_call.1} parent=11 // pred_region
          _
        $region28: #{tpu_custom_call.1} parent=11 // pred_fallthru
          _
        // Predicated region
        $region29: #{tpu_custom_call.1} parent=11 // pred_check
          %p311 = pneg %p165
        $region30: #{tpu_custom_call.1} parent=11 // pred_check_branch
          %313 = sbr.rel (%p311) target = $region32
        $region31: #{tpu_custom_call.1} parent=11 // pred_region
          _
        $region32: #{tpu_custom_call.1} parent=11 // pred_fallthru
          _
        // Predicated region
        $region33: #{tpu_custom_call.1} parent=11 // pred_check
          %p314 = pneg %p186
        $region34: #{tpu_custom_call.1} parent=11 // pred_check_branch
          %316 = sbr.rel (%p314) target = $region36
        $region35: #{tpu_custom_call.1} parent=11 // pred_region
          _
        $region36: #{tpu_custom_call.1} parent=11 // pred_fallthru
          _
        // Predicated region
        $region37: #{tpu_custom_call.1} parent=11 // pred_check
          %p317 = pneg %p207
        $region38: #{tpu_custom_call.1} parent=11 // pred_check_branch
          %319 = sbr.rel (%p317) target = $region40
        $region39: #{tpu_custom_call.1} parent=11 // pred_region
          _
        $region40: #{tpu_custom_call.1} parent=11 // pred_fallthru
          _
        // Predicated region
        $region41: #{tpu_custom_call.1} parent=11 // pred_check
          %p320 = pneg %p228
        $region42: #{tpu_custom_call.1} parent=11 // pred_check_branch
          %322 = sbr.rel (%p320) target = $region44
        $region43: #{tpu_custom_call.1} parent=11 // pred_region
          _
        $region44: #{tpu_custom_call.1} parent=11 // pred_fallthru
          _
      $region12: #{tpu_custom_call.1} parent=5 // pred_fallthru
        _
      %p323 = scmp.lt.s32.totalorder %s20, 2
      // Predicated region
      $region45: #{tpu_custom_call.1} parent=5 // pred_check
        %p324 = pneg %p323
      $region46: #{tpu_custom_call.1} parent=5 // pred_check_branch
        %326 = sbr.rel (%p324) target = $region48
      $region47: #{tpu_custom_call.1} parent=5 // pred_region
        // Predicated region
        $region49: #{tpu_custom_call.1} parent=47 // pred_check
          %p327 = pneg %p54
        $region50: #{tpu_custom_call.1} parent=47 // pred_check_branch
          %329 = sbr.rel (%p327) target = $region52
        $region51: #{tpu_custom_call.1} parent=47 // pred_region
          %p330 = scmp.lt.s32.totalorder %s27, 1
          %s331 = scalar_select %p330, %s27, 1
          %p332 = scmp.lt.s32.totalorder %s28, 0
          %s333 = scalar_select %p332, %s28, 0
          %s334 = smul.addr %s333, 2
          %s335 = smul.addr %s331, 2
          %s336 = sadd.s32 %s334, %s335
          %s337 = smul.addr %s336, 4
          %s338 = scalar_lea.vmem %s0, %s337
        $region52: #{tpu_custom_call.1} parent=47 // pred_fallthru
          _
      $region48: #{tpu_custom_call.1} parent=5 // pred_fallthru
        _
      %p339 = scmp.le.s32.totalorder 1, %s20
      %p340 = scmp.lt.s32.totalorder %s20, 3
      %p341 = pnand %p339, %p340
      %p342 = pneg %p341
      // Predicated region
      $region53: #{tpu_custom_call.1} parent=5 // pred_check
        _
      $region54: #{tpu_custom_call.1} parent=5 // pred_check_branch
        %344 = sbr.rel (%p341) target = $region56
      $region55: #{tpu_custom_call.1} parent=5 // pred_region
        %s345 = ssub.s32 %s20, 1
        %p346 = scmp.lt.s32.totalorder %s29, 1
        %s347 = scalar_select %p346, %s29, 1
        %p348 = scmp.lt.s32.totalorder %s30, 0
        %s349 = scalar_select %p348, %s30, 0
        %s350 = smul.addr %s349, 2
        %s351 = smul.addr %s347, 2
        %s352 = sadd.s32 %s350, %s351
        %s353 = smul.addr %s352, 4
        %s354 = scalar_lea.vmem %s0, %s353
        %p355 = pneg %p60
        %p356 = pneg %p57
        %p357 = pneg %p81
        %p358 = pneg %p78
        %p359 = pneg %p102
        %p360 = pneg %p99
        %p361 = pneg %p123
        %p362 = pneg %p120
        %p363 = pneg %p144
        %p364 = pneg %p141
        %p365 = pneg %p165
        %p366 = pneg %p162
        %p367 = pneg %p186
        %p368 = pneg %p183
        %p369 = pneg %p207
        %p370 = pneg %p204
        %p371 = pneg %p228
        %p372 = pneg %p225
        %p373 = pneg %p256
        %p374 = pneg %p253
        %s375 = sand.u32 %s243, 1
        %s376 = scalar_lea.sflag [#allocation3], %s375
        %s377 = sand.u32 %s243, 1
        %s378 = smul.addr %s377, 4
        %s379 = scalar_lea.vmem [#allocation2], %s378
        %p380 = pneg %p284
        %p381 = pneg %p281
        %p382 = scmp.lt.s32.totalorder %s29, 1
        %s383 = scalar_select %p382, %s29, 1
        %p384 = scmp.lt.s32.totalorder %s30, 0
        %s385 = scalar_select %p384, %s30, 0
        %s386 = smul.addr %s383, 4
        %s387 = sadd.s32 %s385, %s386
        %s388 = smul.addr %s387, 4
        %s389 = scalar_lea.vmem %s10, %s388
        %p390 = scmp.lt.s32.totalorder %s29, 1
        %s391 = scalar_select %p390, %s29, 1
        %p392 = scmp.lt.s32.totalorder %s30, 0
        %s393 = scalar_select %p392, %s30, 0
        %s394 = smul.addr %s393, 2
        %s395 = smul.addr %s391, 2
        %s396 = sadd.s32 %s394, %s395
        %s397 = smul.addr %s396, 4
        %s398 = scalar_lea.vmem %s0, %s397
        %p399 = scmp.lt.s32.totalorder %s29, 1
        %s400 = scalar_select %p399, %s29, 1
        %p401 = scmp.lt.s32.totalorder %s30, 0
        %s402 = scalar_select %p401, %s30, 0
        %s403 = smul.addr %s400, 4
        %s404 = sadd.s32 %s402, %s403
        %s405 = smul.addr %s404, 4
        %s406 = scalar_lea.vmem %s10, %s405
        %v408 = vld [vmem:[%s398] sm:$0xff]
        %v409 = vld [vmem:[%s1] sm:$0xf]
        %v410 = vld [vmem:[%s1 + $0x4] sm:$0xf]
        %v411 = vld [vmem:[%s1 + $0x8] sm:$0xf]
        %v412 = vld [vmem:[%s1 + $0xc] sm:$0xf]
        %v413 = vld [vmem:[%s1 + $0x10] sm:$0xf]
        %v414 = vld [vmem:[%s1 + $0x14] sm:$0xf]
        %v415 = vld [vmem:[%s1 + $0x18] sm:$0xf]
        %v416 = vld [vmem:[%s1 + $0x1c] sm:$0xf]
        %v417 = vld [vmem:[%s1 + $0x20] sm:$0xf]
        %v418 = vld [vmem:[%s1 + $0x24] sm:$0xf]
        %v419 = vld [vmem:[%s1 + $0x28] sm:$0xf]
        %v420 = vld [vmem:[%s1 + $0x2c] sm:$0xf]
        %v421 = vld [vmem:[%s1 + $0x30] sm:$0xf]
        %v422 = vld [vmem:[%s1 + $0x34] sm:$0xf]
        %v423 = vld [vmem:[%s1 + $0x38] sm:$0xf]
        %v424 = vld [vmem:[%s1 + $0x3c] sm:$0xf]
        %v425 = vld [vmem:[%s1 + $0x40] sm:$0xf]
        %v426 = vld [vmem:[%s1 + $0x44] sm:$0xf]
        %v427 = vld [vmem:[%s1 + $0x48] sm:$0xf]
        %v428 = vld [vmem:[%s1 + $0x4c] sm:$0xf]
        %v429 = vld [vmem:[%s1 + $0x50] sm:$0xf]
        %v430 = vld [vmem:[%s1 + $0x54] sm:$0xf]
        %v431 = vld [vmem:[%s1 + $0x58] sm:$0xf]
        %v432 = vld [vmem:[%s1 + $0x5c] sm:$0xf]
        %v433 = vld [vmem:[%s1 + $0x60] sm:$0xf]
        %v434 = vld [vmem:[%s1 + $0x64] sm:$0xf]
        %v435 = vld [vmem:[%s1 + $0x68] sm:$0xf]
        %v436 = vld [vmem:[%s1 + $0x6c] sm:$0xf]
        %v437 = vld [vmem:[%s1 + $0x70] sm:$0xf]
        %v438 = vld [vmem:[%s1 + $0x74] sm:$0xf]
        %v439 = vld [vmem:[%s1 + $0x78] sm:$0xf]
        %v440 = vld [vmem:[%s1 + $0x7c] sm:$0xf]
        %v441 = vld [vmem:[%s2] sm:$0x1]
        %v443 = vlaneseq
        %v444 = vshrl.u32 %v443, 7
        %v445 = vsub.s32 0, %v444
        %v446 = vrot.slane %v441, %v445
        %v449 = vunpack.c.l.b16 %v408
        %v450 = vunpack.c.h.b16 %v408
        %v451 = vpack.c.b16 %v449, %v449
        %v452 = vpack.c.b16 %v450, %v450
        %v487 = vunpack.c.l.b16 %v409
        %v488 = vunpack.c.l.b16 %v410
        %v489 = vunpack.c.l.b16 %v411
        %v490 = vunpack.c.l.b16 %v412
        %v491 = vunpack.c.l.b16 %v413
        %v492 = vunpack.c.l.b16 %v414
        %v493 = vunpack.c.l.b16 %v415
        %v494 = vunpack.c.l.b16 %v416
        %v495 = vunpack.c.l.b16 %v417
        %v496 = vunpack.c.l.b16 %v418
        %v497 = vunpack.c.l.b16 %v419
        %v498 = vunpack.c.l.b16 %v420
        %v499 = vunpack.c.l.b16 %v421
        %v500 = vunpack.c.l.b16 %v422
        %v501 = vunpack.c.l.b16 %v423
        %v502 = vunpack.c.l.b16 %v424
        %v503 = vunpack.c.l.b16 %v425
        %v504 = vunpack.c.l.b16 %v426
        %v505 = vunpack.c.l.b16 %v427
        %v506 = vunpack.c.l.b16 %v428
        %v507 = vunpack.c.l.b16 %v429
        %v508 = vunpack.c.l.b16 %v430
        %v509 = vunpack.c.l.b16 %v431
        %v510 = vunpack.c.l.b16 %v432
        %v511 = vunpack.c.l.b16 %v433
        %v512 = vunpack.c.l.b16 %v434
        %v513 = vunpack.c.l.b16 %v435
        %v514 = vunpack.c.l.b16 %v436
        %v515 = vunpack.c.l.b16 %v437
        %v516 = vunpack.c.l.b16 %v438
        %v517 = vunpack.c.l.b16 %v439
        %v518 = vunpack.c.l.b16 %v440
        %v519 = vpack.c.b16 %v488, %v487
        %v520 = vpack.c.b16 %v490, %v489
        %v521 = vpack.c.b16 %v492, %v491
        %v522 = vpack.c.b16 %v494, %v493
        %v523 = vpack.c.b16 %v496, %v495
        %v524 = vpack.c.b16 %v498, %v497
        %v525 = vpack.c.b16 %v500, %v499
        %v526 = vpack.c.b16 %v502, %v501
        %v527 = vpack.c.b16 %v504, %v503
        %v528 = vpack.c.b16 %v506, %v505
        %v529 = vpack.c.b16 %v508, %v507
        %v530 = vpack.c.b16 %v510, %v509
        %v531 = vpack.c.b16 %v512, %v511
        %v532 = vpack.c.b16 %v514, %v513
        %v533 = vpack.c.b16 %v516, %v515
        %v534 = vpack.c.b16 %v518, %v517
        %551 = vmatprep.subr.bf16.mxu0 0
        %552 = vmatpush1.bf16.msra.mxu0 %v526
        %553 = vmatprep.subr.bf16.mxu0 0
        %554 = vmatpush1.bf16.msra.mxu0 %v525
        %555 = vmatprep.subr.bf16.mxu0 0
        %556 = vmatpush1.bf16.msra.mxu0 %v524
        %557 = vmatprep.subr.bf16.mxu0 0
        %558 = vmatpush1.bf16.msra.mxu0 %v523
        %559 = vmatprep.subr.bf16.mxu0 0
        %560 = vmatpush1.bf16.msra.mxu0 %v522
        %561 = vmatprep.subr.bf16.mxu0 0
        %562 = vmatpush1.bf16.msra.mxu0 %v521
        %563 = vmatprep.subr.bf16.mxu0 0
        %564 = vmatpush1.bf16.msra.mxu0 %v520
        %565 = vmatprep.subr.bf16.mxu0 0
        %566 = vmatpush1.bf16.msra.mxu0 %v519
        %567 = vmatprep.subr.bf16.mxu0 0
        %568 = vmatpush2.bf16.msra.mxu0 %v534
        %569 = vmatprep.subr.bf16.mxu0 0
        %570 = vmatpush2.bf16.msra.mxu0 %v533
        %571 = vmatprep.subr.bf16.mxu0 0
        %572 = vmatpush2.bf16.msra.mxu0 %v532
        %573 = vmatprep.subr.bf16.mxu0 0
        %574 = vmatpush2.bf16.msra.mxu0 %v531
        %575 = vmatprep.subr.bf16.mxu0 0
        %576 = vmatpush2.bf16.msra.mxu0 %v530
        %577 = vmatprep.subr.bf16.mxu0 0
        %578 = vmatpush2.bf16.msra.mxu0 %v529
        %579 = vmatprep.subr.bf16.mxu0 0
        %580 = vmatpush2.bf16.msra.mxu0 %v528
        %581 = vmatprep.subr.bf16.mxu0 0
        %582 = vmatpush2.bf16.msra.mxu0 %v527
        %583 = vmatprep.mubr.bf16.mxu0 %v452
        %584 = vmatmul.mubr.bf16.gmra.mxu0 %v451
        %v585 = vpop.f32.mrf.mxu0
        %v586 = vadd.f32 %v446, %v585
        %v587 = vpop.f32.mrf.mxu0
        %v588 = vpop.f32.mrf.mxu0
        %v589 = vpop.f32.mrf.mxu0
        %590 = vdwg.mxu0
        %vm591 = vcmask 261120
        %v592 = vsel %vm591, %v586, 0.0
        %593 = vadd.xlane.f32.xlu0 %v592
        %v594 = vpop.xlane.xlu0 %593
        %v595 = vrcp.pop 32.0
        %v596 = vmul.f32 %v594, %v595
        %v597 = vsub.f32 %v586, %v596
        %v598 = vmul.f32 %v597, %v597
        %v599 = vsel %vm591, %v598, 0.0
        %600 = vadd.xlane.f32.xlu0 %v599
        %v601 = vpop.xlane.xlu0 %600
        %v602 = vmul.f32 %v601, %v595
        %v603 = vadd.f32 %v602, 1e-05
        %v604 = vrsqrt.pop %v603
        %v605 = vmul.f32 %v597, %v604
        %v606 = vld [vmem:[%s3] sm:$0x1]
        %v608 = vlaneseq
        %v609 = vshrl.u32 %v608, 7
        %v610 = vsub.s32 0, %v609
        %v611 = vrot.slane %v606, %v610
        %v613 = vmul.f32 %v605, %v611
        %v614 = vld [vmem:[%s4] sm:$0x1]
        %v616 = vlaneseq
        %v617 = vshrl.u32 %v616, 7
        %v618 = vsub.s32 0, %v617
        %v619 = vrot.slane %v614, %v618
        %v621 = vadd.f32 %v613, %v619
        %v622 = vpack.c.bf16 %v621, %v621
        %v623 = vld [vmem:[%s5] sm:$0xf]
        %v624 = vld [vmem:[%s5 + $0x4] sm:$0xf]
        %v625 = vld [vmem:[%s5 + $0x8] sm:$0xf]
        %v626 = vld [vmem:[%s5 + $0xc] sm:$0xf]
        %v627 = vld [vmem:[%s6] sm:$0x1]
        %v629 = vlaneseq
        %v630 = vshrl.u32 %v629, 7
        %v631 = vsub.s32 0, %v630
        %v632 = vrot.slane %v627, %v631
        %v638 = vunpack.c.l.b16 %v623
        %v639 = vunpack.c.l.b16 %v624
        %v640 = vunpack.c.l.b16 %v625
        %v641 = vunpack.c.l.b16 %v626
        %v642 = vpack.c.b16 %v639, %v638
        %v643 = vpack.c.b16 %v641, %v640
        %v647 = vsel %vm591, %v622, 0
        %649 = vmatprep.subr.bf16.mxu0 0
        %650 = vmatpush1.bf16.msra.mxu0 0
        %651 = vmatprep.subr.bf16.mxu0 0
        %652 = vmatpush1.bf16.msra.mxu0 0
        %653 = vmatprep.subr.bf16.mxu0 0
        %654 = vmatpush1.bf16.msra.mxu0 0
        %655 = vmatprep.subr.bf16.mxu0 0
        %656 = vmatpush1.bf16.msra.mxu0 0
        %657 = vmatprep.subr.bf16.mxu0 0
        %658 = vmatpush1.bf16.msra.mxu0 0
        %659 = vmatprep.subr.bf16.mxu0 0
        %660 = vmatpush1.bf16.msra.mxu0 0
        %661 = vmatprep.subr.bf16.mxu0 0
        %662 = vmatpush1.bf16.msra.mxu0 %v643
        %663 = vmatprep.subr.bf16.mxu0 0
        %664 = vmatpush1.bf16.msra.mxu0 %v642
        %665 = vmatprep.subr.bf16.mxu0 0
        %666 = vmatpush2.bf16.msra.mxu0 0
        %667 = vmatprep.subr.bf16.mxu0 0
        %668 = vmatpush2.bf16.msra.mxu0 0
        %669 = vmatprep.subr.bf16.mxu0 0
        %670 = vmatpush2.bf16.msra.mxu0 0
        %671 = vmatprep.subr.bf16.mxu0 0
        %672 = vmatpush2.bf16.msra.mxu0 0
        %673 = vmatprep.subr.bf16.mxu0 0
        %674 = vmatpush2.bf16.msra.mxu0 0
        %675 = vmatprep.subr.bf16.mxu0 0
        %676 = vmatpush2.bf16.msra.mxu0 0
        %677 = vmatprep.subr.bf16.mxu0 0
        %678 = vmatpush2.bf16.msra.mxu0 0
        %679 = vmatprep.subr.bf16.mxu0 0
        %680 = vmatpush2.bf16.msra.mxu0 0
        %681 = vmatprep.mubr.bf16.mxu0 0
        %682 = vmatmul.mubr.bf16.gmra.mxu0 %v647
        %v683 = vpop.f32.mrf.mxu0
        %v684 = vadd.f32 %v632, %v683
        %v685 = vpop.f32.mrf.mxu0
        %v686 = vpop.f32.mrf.mxu0
        %v687 = vpop.f32.mrf.mxu0
        %688 = vdwg.mxu0
        %v689 = vpack.c.bf16 %v684, %v684
        %vm690 = vcmask 257024
        %691 = vst.msk [vmem:[%s379] sm:$0xf] %vm690, %v689
        %v692 = vld [vmem:[%s7] sm:$0xf]
        %v693 = vld [vmem:[%s7 + $0x4] sm:$0xf]
        %v694 = vld [vmem:[%s7 + $0x8] sm:$0xf]
        %v695 = vld [vmem:[%s7 + $0xc] sm:$0xf]
        %v696 = vld [vmem:[%s8] sm:$0xff]
        %v697 = vld [vmem:[%s8 + $0x8] sm:$0xff]
        %v698 = vld [vmem:[%s8 + $0x10] sm:$0xff]
        %v699 = vld [vmem:[%s8 + $0x18] sm:$0xff]
        %701 = vset.pattern.permute.xlu0 0
        %702 = vperm.xlu0 %701, %v696
        %v703 = vpop.permute.xlu0 %702
        %706 = vset.pattern.permute.xlu0 0
        %707 = vperm.xlu0 %706, %v697
        %v708 = vpop.permute.xlu0 %707
        %711 = vset.pattern.permute.xlu0 0
        %712 = vperm.xlu0 %711, %v698
        %v713 = vpop.permute.xlu0 %712
        %716 = vset.pattern.permute.xlu0 0
        %717 = vperm.xlu0 %716, %v699
        %v718 = vpop.permute.xlu0 %717
        %v724 = vunpack.c.l.b16 %v692
        %v725 = vunpack.c.l.b16 %v693
        %v726 = vunpack.c.l.b16 %v694
        %v727 = vunpack.c.l.b16 %v695
        %v728 = vpack.c.b16 %v725, %v724
        %v729 = vpack.c.b16 %v727, %v726
        %v731 = vsel %vm591, %v728, 0
        %v734 = vsel %vm591, %v729, 0
        %736 = vmatprep.subr.bf16.mxu0 0
        %737 = vmatpush1.bf16.xpose.msra.mxu0 0
        %738 = vmatprep.subr.bf16.mxu0 0
        %739 = vmatpush1.bf16.xpose.msra.mxu0 0
        %740 = vmatprep.subr.bf16.mxu0 0
        %741 = vmatpush1.bf16.xpose.msra.mxu0 0
        %742 = vmatprep.subr.bf16.mxu0 0
        %743 = vmatpush1.bf16.xpose.msra.mxu0 0
        %744 = vmatprep.subr.bf16.mxu0 0
        %745 = vmatpush1.bf16.xpose.msra.mxu0 0
        %746 = vmatprep.subr.bf16.mxu0 0
        %747 = vmatpush1.bf16.xpose.msra.mxu0 0
        %748 = vmatprep.subr.bf16.mxu0 0
        %749 = vmatpush1.bf16.xpose.msra.mxu0 0
        %750 = vmatprep.subr.bf16.mxu0 0
        %751 = vmatpush1.bf16.xpose.msra.mxu0 %v647
        %752 = vmatprep.subr.bf16.mxu0 0
        %753 = vmatpush2.bf16.xpose.msra.mxu0 0
        %754 = vmatprep.subr.bf16.mxu0 0
        %755 = vmatpush2.bf16.xpose.msra.mxu0 0
        %756 = vmatprep.subr.bf16.mxu0 0
        %757 = vmatpush2.bf16.xpose.msra.mxu0 0
        %758 = vmatprep.subr.bf16.mxu0 0
        %759 = vmatpush2.bf16.xpose.msra.mxu0 0
        %760 = vmatprep.subr.bf16.mxu0 0
        %761 = vmatpush2.bf16.xpose.msra.mxu0 0
        %762 = vmatprep.subr.bf16.mxu0 0
        %763 = vmatpush2.bf16.xpose.msra.mxu0 0
        %764 = vmatprep.subr.bf16.mxu0 0
        %765 = vmatpush2.bf16.xpose.msra.mxu0 0
        %766 = vmatprep.subr.bf16.mxu0 0
        %767 = vmatpush2.bf16.xpose.msra.mxu0 0
        %768 = vmatprep.mubr.bf16.mxu0 0
        %769 = vmatmul.mubr.bf16.gmra.mxu0 %v731
        %v770 = vpop.f32.mrf.mxu0
        %v771 = vadd.f32 %v703, %v770
        %v772 = vpop.f32.mrf.mxu0
        %v773 = vpop.f32.mrf.mxu0
        %v774 = vadd.f32 %v708, %v773
        %v775 = vpop.f32.mrf.mxu0
        %776 = vmatprep.mubr.bf16.mxu0 0
        %777 = vmatmul.mubr.bf16.gmra.mxu0 %v734
        %v778 = vpop.f32.mrf.mxu0
        %v779 = vadd.f32 %v713, %v778
        %v780 = vpop.f32.mrf.mxu0
        %v781 = vpop.f32.mrf.mxu0
        %v782 = vadd.f32 %v718, %v781
        %v783 = vpop.f32.mrf.mxu0
        %784 = vdwg.mxu0
        %v785 = vpack.c.bf16 %v774, %v771
        %v786 = vpack.c.bf16 %v782, %v779
        %v789 = vunpack.c.l.b16 %v785
        %v790 = vunpack.c.h.b16 %v785
        %v791 = vunpack.c.l.b16 %v786
        %v792 = vunpack.c.h.b16 %v786
        %v793 = vpack.c.b16 %v789, %v789
        %v794 = vpack.c.b16 %v790, %v790
        %v795 = vpack.c.b16 %v791, %v791
        %v796 = vpack.c.b16 %v792, %v792
        %vm801 = vcmask 60416
        %802 = vst.msk [vmem:[%s406] sm:$0xf] %vm801, %v793
        %803 = vst.msk [vmem:[%s406 + $0x4] sm:$0xf] %vm801, %v794
        %804 = vst.msk [vmem:[%s406 + $0x8] sm:$0xf] %vm801, %v795
        %805 = vst.msk [vmem:[%s406 + $0xc] sm:$0xf] %vm801, %v796
        %s806 = sand.u32 %s243, 1
        %s807 = scalar_lea.sflag [#allocation3], %s806
        %s808 = sand.u32 %s243, 1
        %s809 = smul.addr %s808, 4
        %s810 = scalar_lea.vmem [#allocation2], %s809
        %p811 = scmp.lt.s32.totalorder %s29, 1
        %s812 = scalar_select %p811, %s29, 1
        %p813 = scmp.lt.s32.totalorder %s30, 0
        %s814 = scalar_select %p813, %s30, 0
        %s815 = smul.addr %s812, 4
        %s816 = sadd.s32 %s814, %s815
        %s817 = smul.addr %s816, 4
        %s818 = scalar_lea.vmem %s10, %s817
        // Predicated region
        $region57: #{tpu_custom_call.1} parent=55 // pred_check
          %p819 = pneg %p253
        $region58: #{tpu_custom_call.1} parent=55 // pred_check_branch
          %821 = sbr.rel (%p819) target = $region60
        $region59: #{tpu_custom_call.1} parent=55 // pred_region
          %s823 = ssub.s32 64, 64
          %824 = vsyncadd %s807, %s823
          %s825 = sadd.s32 %s30, %s29
          %s826 = smul.addr %s825, 64
          %s827 = scalar_lea.hbm %s9, %s826
          %s829 = sshll.u32 %s810, 4
          %s830 = int_to_ptr.vmem [resolvable:$true] %s829
          %832 = dma.vmem_to_hbm [thread:$0]  %s830, 64, %s827, %s807
        $region60: #{tpu_custom_call.1} parent=55 // pred_fallthru
          _
        // Predicated region
        $region61: #{tpu_custom_call.1} parent=55 // pred_check
          %p833 = pneg %p281
        $region62: #{tpu_custom_call.1} parent=55 // pred_check_branch
          %835 = sbr.rel (%p833) target = $region64
        $region63: #{tpu_custom_call.1} parent=55 // pred_region
          _
        $region64: #{tpu_custom_call.1} parent=55 // pred_fallthru
          _
      $region56: #{tpu_custom_call.1} parent=5 // pred_fallthru
        _
      %p836 = scmp.le.s32.totalorder 2, %s20
      // Predicated region
      $region65: #{tpu_custom_call.1} parent=5 // pred_check
        %p837 = pneg %p836
      $region66: #{tpu_custom_call.1} parent=5 // pred_check_branch
        %839 = sbr.rel (%p837) target = $region68
      $region67: #{tpu_custom_call.1} parent=5 // pred_region
        %s840 = ssub.s32 %s20, 2
        // Predicated region
        $region69: #{tpu_custom_call.1} parent=67 // pred_check
          %p841 = pneg %p259
        $region70: #{tpu_custom_call.1} parent=67 // pred_check_branch
          %843 = sbr.rel (%p841) target = $region72
        $region71: #{tpu_custom_call.1} parent=67 // pred_region
          %s844 = sand.u32 %s244, 1
          %s845 = scalar_lea.sflag [#allocation3], %s844
          %s846 = sand.u32 %s244, 1
          %s847 = smul.addr %s846, 4
          %s848 = scalar_lea.vmem [#allocation2], %s847
          %849 = dma.done %s845, 64
        $region72: #{tpu_custom_call.1} parent=67 // pred_fallthru
          _
        // Predicated region
        $region73: #{tpu_custom_call.1} parent=67 // pred_check
          %p850 = pneg %p287
        $region74: #{tpu_custom_call.1} parent=67 // pred_check_branch
          %852 = sbr.rel (%p850) target = $region76
        $region75: #{tpu_custom_call.1} parent=67 // pred_region
          %p853 = scmp.lt.s32.totalorder %s31, 1
          %s854 = scalar_select %p853, %s31, 1
          %p855 = scmp.lt.s32.totalorder %s32, 0
          %s856 = scalar_select %p855, %s32, 0
          %s857 = smul.addr %s854, 4
          %s858 = sadd.s32 %s856, %s857
          %s859 = smul.addr %s858, 4
          %s860 = scalar_lea.vmem %s10, %s859
        $region76: #{tpu_custom_call.1} parent=67 // pred_fallthru
          _
      $region68: #{tpu_custom_call.1} parent=5 // pred_fallthru
        _
    $region6: #{tpu_custom_call.1} parent=1 // loop_footer
      %s24 = sadd.s32 1, %s20
    $region7: #{tpu_custom_call.1} parent=1 // loop_footer_branch
      %19 = sbr.rel target = $region3
    $region8: #{tpu_custom_call.1} parent=1 // loop_exit
      _
    %861 = vsyncpa [#allocation3], 1
    %s862 = scalar_lea.sflag [#allocation3], 1
    %863 = vsyncpa %s862, 1

</llo_original>
